<compile_context>
chip_gen: v7x
topology: tpu7x:2x2x1
jax: 0.10.0
libtpu: 0.0.40
codegen_flags: <defaults>
</compile_context>

<pallas_src>
import jax
import jax.numpy as jnp
from jax import lax
from jax.experimental import pallas as pl
from jax.experimental.pallas import tpu as pltpu

BN_EPS = 1e-5
# MXU operand dtype only; accumulation (preferred_element_type) and BN stats stay f32.
MATMUL_DTYPE = jnp.bfloat16


def conv1d_net_kernel(x_ref, w1_ref, w2_ref, bn_ref, out_ref):
    # x_ref:   (B*L, Cin)   bf16, channel-last rows (row r = batch b, position t)
    # w1_ref:  (3*Cin, C1)  bf16, tap-major (tap0 -> x[t-1], tap1 -> x[t], tap2 -> x[t+1])
    # w2_ref:  (2*C1, C2)   bf16, tap-major (tap0 -> h1[t], tap1 -> h1[t+1])
    # bn_ref:  (4, Cmax)    f32 rows: [gamma1, beta1, gamma2, beta2]
    # out_ref: (B, C2)      f32
    BL, Cin = x_ref.shape
    C1 = w1_ref.shape[1]
    B, C2 = out_ref.shape
    L = BL // B
    Lo = L - 1

    row = lax.broadcasted_iota(jnp.int32, (BL, 1), 0)
    tpos = row % L
    first = tpos == 0                       # per-batch t == 0 rows
    last = tpos == (L - 1)                  # per-batch t == L-1 rows

    # ---- conv1 (k=3, pad=1): three K=Cin bf16 MXU dots.  Rows are independent, so the
    # shifted taps are realigned AFTER the matmul with an XLU roll; the rows that would
    # have read the zero padding are masked out.  Conv bias is omitted: training-mode BN
    # subtracts the batch mean immediately, so a per-channel constant cancels exactly.
    xb = x_ref[...]
    a_prev = jnp.dot(xb, w1_ref[0:Cin, :], preferred_element_type=jnp.float32)
    a_mid = jnp.dot(xb, w1_ref[Cin:2 * Cin, :], preferred_element_type=jnp.float32)
    a_next = jnp.dot(xb, w1_ref[2 * Cin:3 * Cin, :], preferred_element_type=jnp.float32)
    y1 = a_mid
    y1 = y1 + jnp.where(first, 0.0, pltpu.roll(a_prev, shift=1, axis=0))       # W0 . x[t-1]
    y1 = y1 + jnp.where(last, 0.0, pltpu.roll(a_next, shift=BL - 1, axis=0))   # W2 . x[t+1]

    # ---- BatchNorm1d (training-mode biased stats over all B*L rows, two-pass) + ReLU ----
    g1 = bn_ref[0:1, 0:C1]
    be1 = bn_ref[1:2, 0:C1]
    inv_n1 = 1.0 / float(BL)
    mu1 = jnp.sum(y1, axis=0, keepdims=True) * inv_n1
    d1 = y1 - mu1
    var1 = jnp.sum(d1 * d1, axis=0, keepdims=True) * inv_n1
    h1 = jnp.maximum(d1 * (g1 * lax.rsqrt(var1 + BN_EPS)) + be1, 0.0)          # (B*L, C1) f32

    # ---- conv2 (k=2, pad=0): two accumulated K=C1 bf16 dots; tap1 realigned with a roll.
    # The roll-wrapped rows are exactly the per-batch t == L-1 rows that conv2 discards,
    # so they are masked out of the BN2 statistics and the final mean below.
    h1b = h1.astype(MATMUL_DTYPE)
    p0 = jnp.dot(h1b, w2_ref[0:C1, :], preferred_element_type=jnp.float32)
    p1 = jnp.dot(h1b, w2_ref[C1:2 * C1, :], preferred_element_type=jnp.float32)
    y2 = p0 + pltpu.roll(p1, shift=BL - 1, axis=0)                              # (B*L, C2) f32

    valid = jnp.logical_not(last)                                               # (B*L, 1)

    # ---- BatchNorm1d over the B*(L-1) valid rows (two-pass) + ReLU ----
    g2 = bn_ref[2:3, 0:C2]
    be2 = bn_ref[3:4, 0:C2]
    inv_n2 = 1.0 / float(B * Lo)
    mu2 = jnp.sum(jnp.where(valid, y2, 0.0), axis=0, keepdims=True) * inv_n2
    d2 = y2 - mu2
    var2 = jnp.sum(jnp.where(valid, d2 * d2, 0.0), axis=0, keepdims=True) * inv_n2
    h2 = jnp.where(valid,
                   jnp.maximum(d2 * (g2 * lax.rsqrt(var2 + BN_EPS)) + be2, 0.0),
                   0.0)                                                         # (B*L, C2)

    # ---- mean over length (L-1 valid positions), one coalesced lane-dense store ----
    out_ref[...] = jnp.sum(h2.reshape(B, L, C2), axis=1) * (1.0 / float(Lo))


def init_params(key, input_size, c1=128, c2=128):
    """Deterministic parameter init (PyTorch-like uniform for conv, 1/0 for BN)."""
    k1, k2, k3, k4 = jax.random.split(key, 4)
    bound1 = 1.0 / (input_size * 3) ** 0.5
    w1 = jax.random.uniform(k1, (3, input_size, c1), jnp.float32, -bound1, bound1)
    b1 = jax.random.uniform(k2, (1, c1), jnp.float32, -bound1, bound1)
    bound2 = 1.0 / (c1 * 2) ** 0.5
    w2 = jax.random.uniform(k3, (2, c1, c2), jnp.float32, -bound2, bound2)
    b2 = jax.random.uniform(k4, (1, c2), jnp.float32, -bound2, bound2)
    g1 = jnp.ones((1, c1), jnp.float32)
    be1 = jnp.zeros((1, c1), jnp.float32)
    g2 = jnp.ones((1, c2), jnp.float32)
    be2 = jnp.zeros((1, c2), jnp.float32)
    return (w1, b1, g1, be1, w2, b2, g2, be2)


def conv1d_forward(x, params):
    # x: (B, L, F) exactly as fed to the PyTorch module; the module does
    # x.reshape(B, x.shape[2], x.shape[1]) -- a memory reshape, NOT a transpose.
    B, L, F = x.shape
    w1, b1, g1, be1, w2, b2, g2, be2 = params
    del b1, b2  # cancelled exactly by the training-mode BatchNorm mean subtraction
    assert w1.shape[1] == F, "input_size must equal x.shape[2]"
    C1 = w1.shape[2]
    C2 = w2.shape[2]

    # Reproduce the PyTorch memory reshape, go channel-last, flatten to rows.  The
    # transpose is the only wrapper-side data movement; im2col happens in-kernel.
    x_rows = jnp.transpose(jnp.reshape(x, (B, F, L)), (0, 2, 1)).reshape(B * L, F)
    x_rows = x_rows.astype(MATMUL_DTYPE)

    w1col = w1.reshape(3 * F, C1).astype(MATMUL_DTYPE)    # tap-major (k, Cin) rows
    w2col = w2.reshape(2 * C1, C2).astype(MATMUL_DTYPE)   # tap-major (k, C1) rows

    # Pack the four per-channel BN vectors into one (4, Cmax) f32 operand (one DMA).
    Cmax = max(C1, C2)
    def _row(v, c):
        return jnp.pad(v.astype(jnp.float32), ((0, 0), (0, Cmax - c)))
    bn_pack = jnp.concatenate([_row(g1, C1), _row(be1, C1),
                               _row(g2, C2), _row(be2, C2)], axis=0)   # (4, Cmax)

    operands = (x_rows, w1col, w2col, bn_pack)

    def full_spec(shape):
        nd = len(shape)
        return pl.BlockSpec(shape, lambda i, nd=nd: (0,) * nd)

    flops = 2 * B * L * (3 * F * C1 + 2 * C1 * C2) + 16 * B * L * (C1 + C2)
    bytes_accessed = sum(int(op.size) * op.dtype.itemsize for op in operands) + B * C2 * 4

    out = pl.pallas_call(
        conv1d_net_kernel,
        out_shape=jax.ShapeDtypeStruct((B, C2), jnp.float32),
        grid=(1,),
        in_specs=[full_spec(op.shape) for op in operands],
        out_specs=pl.BlockSpec((B, C2), lambda i: (0, 0)),
        compiler_params=pltpu.CompilerParams(dimension_semantics=("arbitrary",)),
        cost_estimate=pl.CostEstimate(flops=flops, transcendentals=C1 + C2,
                                      bytes_accessed=bytes_accessed),
    )(*operands)
    return out


if __name__ == "__main__":
    key = jax.random.PRNGKey(0)
    kx, kp = jax.random.split(key)

    # small shapes: batch=2, seq=16, features=8  => input_size = 8
    B, L, F = 2, 16, 8
    x = jax.random.normal(kx, (B, L, F), jnp.float32)
    params = init_params(kp, input_size=F, c1=128, c2=128)

    out = conv1d_forward(x, params)
    out = jax.block_until_ready(out)
    assert out.shape == (B, 128) and out.dtype == jnp.float32
    assert bool(jnp.all(jnp.isfinite(out)))
    print("KERNEL_OK")
</pallas_src>

<mosaic_0001>
module attributes {stable_mosaic.version = 11 : i64} {
  func.func @conv1d_net_kernel(%arg0: i32, %arg1: memref<32x8xbf16, #tpu.memory_space<vmem>>, %arg2: memref<24x128xbf16, #tpu.memory_space<vmem>>, %arg3: memref<256x128xbf16, #tpu.memory_space<vmem>>, %arg4: memref<4x128xf32, #tpu.memory_space<vmem>>, %arg5: memref<2x128xf32, #tpu.memory_space<vmem>>) attributes {dimension_semantics = [#tpu.dimension_semantics<arbitrary>], iteration_bounds = array<i64: 1>, scalar_prefetch = 0 : i64, scratch_operands = 0 : i64, tpu.core_type = #tpu.core_type<tc>, window_params = [{pipeline_mode = #tpu.pipeline_mode<synchronous>, transform_indices = @transform_0, window_bounds = array<i64: 32, 8>}, {pipeline_mode = #tpu.pipeline_mode<synchronous>, transform_indices = @transform_1, window_bounds = array<i64: 24, 128>}, {pipeline_mode = #tpu.pipeline_mode<synchronous>, transform_indices = @transform_2, window_bounds = array<i64: 256, 128>}, {pipeline_mode = #tpu.pipeline_mode<synchronous>, transform_indices = @transform_3, window_bounds = array<i64: 4, 128>}, {pipeline_mode = #tpu.pipeline_mode<synchronous>, transform_indices = @transform_4, window_bounds = array<i64: 2, 128>}]} {
    %0 = tpu.iota {dimensions = array<i32: 0>} : vector<32x1xi32>
    %c16_i32 = arith.constant 16 : i32
    %c0_i32 = arith.constant 0 : i32
    %1 = arith.cmpi eq, %c16_i32, %c0_i32 : i32
    %c1_i32 = arith.constant 1 : i32
    %2 = arith.select %1, %c1_i32, %c16_i32 : i32
    %3 = vector.broadcast %2 : i32 to vector<32x1xi32>
    %4 = arith.remsi %0, %3 : vector<32x1xi32>
    %c0_i32_0 = arith.constant 0 : i32
    %5 = vector.broadcast %c0_i32_0 : i32 to vector<32x1xi32>
    %6 = arith.cmpi ne, %4, %5 : vector<32x1xi32>
    %c0_i32_1 = arith.constant 0 : i32
    %7 = vector.broadcast %c0_i32_1 : i32 to vector<32x1xi32>
    %8 = arith.cmpi slt, %4, %7 : vector<32x1xi32>
    %c0_i32_2 = arith.constant 0 : i32
    %9 = arith.cmpi slt, %2, %c0_i32_2 : i32
    %10 = vector.broadcast %9 : i1 to vector<32x1xi1>
    %11 = vector.broadcast %10 : vector<32x1xi1> to vector<32x1xi1>
    %12 = arith.xori %8, %11 : vector<32x1xi1>
    %13 = arith.andi %12, %6 : vector<32x1xi1>
    %14 = vector.broadcast %2 : i32 to vector<32x1xi32>
    %15 = arith.addi %4, %14 : vector<32x1xi32>
    %16 = arith.select %13, %15, %4 : vector<32x1xi1>, vector<32x1xi32>
    %c0_i32_3 = arith.constant 0 : i32
    %17 = vector.broadcast %c0_i32_3 : i32 to vector<32x1xi32>
    %18 = arith.cmpi eq, %16, %17 : vector<32x1xi32>
    %c15_i32 = arith.constant 15 : i32
    %19 = vector.broadcast %c15_i32 : i32 to vector<32x1xi32>
    %20 = arith.cmpi eq, %16, %19 : vector<32x1xi32>
    %c0 = arith.constant 0 : index
    %c0_4 = arith.constant 0 : index
    %21 = vector.load %arg1[%c0, %c0_4] : memref<32x8xbf16, #tpu.memory_space<vmem>>, vector<32x8xbf16>
    %c0_5 = arith.constant 0 : index
    %c0_6 = arith.constant 0 : index
    %22 = vector.load %arg2[%c0_5, %c0_6] : memref<24x128xbf16, #tpu.memory_space<vmem>>, vector<8x128xbf16>
    %cst = arith.constant dense<0.000000e+00> : vector<32x128xf32>
    %23 = tpu.matmul %21, %22, %cst {dimension_numbers = #tpu.dot_dimension_numbers<[1], [0], [0], [1], [0, 0, 1, 1], [], []>} : vector<32x8xbf16>, vector<8x128xbf16>, vector<32x128xf32> -> vector<32x128xf32>
    %c8 = arith.constant 8 : index
    %c0_7 = arith.constant 0 : index
    %24 = vector.load %arg2[%c8, %c0_7] : memref<24x128xbf16, #tpu.memory_space<vmem>>, vector<8x128xbf16>
    %cst_8 = arith.constant dense<0.000000e+00> : vector<32x128xf32>
    %25 = tpu.matmul %21, %24, %cst_8 {dimension_numbers = #tpu.dot_dimension_numbers<[1], [0], [0], [1], [0, 0, 1, 1], [], []>} : vector<32x8xbf16>, vector<8x128xbf16>, vector<32x128xf32> -> vector<32x128xf32>
    %c16 = arith.constant 16 : index
    %c0_9 = arith.constant 0 : index
    %26 = vector.load %arg2[%c16, %c0_9] : memref<24x128xbf16, #tpu.memory_space<vmem>>, vector<8x128xbf16>
    %cst_10 = arith.constant dense<0.000000e+00> : vector<32x128xf32>
    %27 = tpu.matmul %21, %26, %cst_10 {dimension_numbers = #tpu.dot_dimension_numbers<[1], [0], [0], [1], [0, 0, 1, 1], [], []>} : vector<32x8xbf16>, vector<8x128xbf16>, vector<32x128xf32> -> vector<32x128xf32>
    %c1_i32_11 = arith.constant 1 : i32
    %28 = tpu.dynamic_rotate %23 by %c1_i32_11 dim 0 : vector<32x128xf32>, i32 -> vector<32x128xf32>
    %cst_12 = arith.constant 0.000000e+00 : f32
    %29 = vector.shape_cast %18 : vector<32x1xi1> to vector<32x1xi1>
    %30 = vector.broadcast %29 : vector<32x1xi1> to vector<32x128xi1>
    %31 = vector.broadcast %cst_12 : f32 to vector<32x128xf32>
    %32 = arith.select %30, %31, %28 : vector<32x128xi1>, vector<32x128xf32>
    %33 = arith.addf %25, %32 : vector<32x128xf32>
    %c31_i32 = arith.constant 31 : i32
    %34 = tpu.dynamic_rotate %27 by %c31_i32 dim 0 : vector<32x128xf32>, i32 -> vector<32x128xf32>
    %cst_13 = arith.constant 0.000000e+00 : f32
    %35 = vector.shape_cast %20 : vector<32x1xi1> to vector<32x1xi1>
    %36 = vector.broadcast %35 : vector<32x1xi1> to vector<32x128xi1>
    %37 = vector.broadcast %cst_13 : f32 to vector<32x128xf32>
    %38 = arith.select %36, %37, %34 : vector<32x128xi1>, vector<32x128xf32>
    %39 = arith.addf %33, %38 : vector<32x128xf32>
    %c0_14 = arith.constant 0 : index
    %c0_15 = arith.constant 0 : index
    %40 = vector.load %arg4[%c0_14, %c0_15] : memref<4x128xf32, #tpu.memory_space<vmem>>, vector<1x128xf32>
    %c1 = arith.constant 1 : index
    %c0_16 = arith.constant 0 : index
    %41 = vector.load %arg4[%c1, %c0_16] : memref<4x128xf32, #tpu.memory_space<vmem>>, vector<1x128xf32>
    %cst_17 = arith.constant dense<0.000000e+00> : vector<128xf32>
    %42 = vector.multi_reduction <add>, %39, %cst_17 [0] : vector<32x128xf32> to vector<128xf32>
    %43 = vector.shape_cast %42 : vector<128xf32> to vector<1x128xf32>
    %cst_18 = arith.constant 3.125000e-02 : f32
    %44 = vector.broadcast %cst_18 : f32 to vector<1x128xf32>
    %45 = arith.mulf %43, %44 : vector<1x128xf32>
    %46 = vector.broadcast %45 : vector<1x128xf32> to vector<32x128xf32>
    %47 = arith.subf %39, %46 : vector<32x128xf32>
    %48 = arith.mulf %47, %47 : vector<32x128xf32>
    %cst_19 = arith.constant dense<0.000000e+00> : vector<128xf32>
    %49 = vector.multi_reduction <add>, %48, %cst_19 [0] : vector<32x128xf32> to vector<128xf32>
    %50 = vector.shape_cast %49 : vector<128xf32> to vector<1x128xf32>
    %cst_20 = arith.constant 3.125000e-02 : f32
    %51 = vector.broadcast %cst_20 : f32 to vector<1x128xf32>
    %52 = arith.mulf %50, %51 : vector<1x128xf32>
    %cst_21 = arith.constant 9.99999974E-6 : f32
    %53 = vector.broadcast %cst_21 : f32 to vector<1x128xf32>
    %54 = arith.addf %52, %53 : vector<1x128xf32>
    %55 = math.rsqrt %54 : vector<1x128xf32>
    %56 = arith.mulf %40, %55 : vector<1x128xf32>
    %57 = vector.broadcast %56 : vector<1x128xf32> to vector<32x128xf32>
    %58 = arith.mulf %47, %57 : vector<32x128xf32>
    %59 = vector.broadcast %41 : vector<1x128xf32> to vector<32x128xf32>
    %60 = arith.addf %58, %59 : vector<32x128xf32>
    %cst_22 = arith.constant 0.000000e+00 : f32
    %61 = vector.broadcast %cst_22 : f32 to vector<32x128xf32>
    %62 = arith.maximumf %60, %61 : vector<32x128xf32>
    %63 = arith.truncf %62 : vector<32x128xf32> to vector<32x128xbf16>
    %c0_23 = arith.constant 0 : index
    %c0_24 = arith.constant 0 : index
    %64 = vector.load %arg3[%c0_23, %c0_24] : memref<256x128xbf16, #tpu.memory_space<vmem>>, vector<128x128xbf16>
    %cst_25 = arith.constant dense<0.000000e+00> : vector<32x128xf32>
    %65 = tpu.matmul %63, %64, %cst_25 {dimension_numbers = #tpu.dot_dimension_numbers<[1], [0], [0], [1], [0, 0, 1, 1], [], []>} : vector<32x128xbf16>, vector<128x128xbf16>, vector<32x128xf32> -> vector<32x128xf32>
    %c128 = arith.constant 128 : index
    %c0_26 = arith.constant 0 : index
    %66 = vector.load %arg3[%c128, %c0_26] : memref<256x128xbf16, #tpu.memory_space<vmem>>, vector<128x128xbf16>
    %cst_27 = arith.constant dense<0.000000e+00> : vector<32x128xf32>
    %67 = tpu.matmul %63, %66, %cst_27 {dimension_numbers = #tpu.dot_dimension_numbers<[1], [0], [0], [1], [0, 0, 1, 1], [], []>} : vector<32x128xbf16>, vector<128x128xbf16>, vector<32x128xf32> -> vector<32x128xf32>
    %c31_i32_28 = arith.constant 31 : i32
    %68 = tpu.dynamic_rotate %67 by %c31_i32_28 dim 0 : vector<32x128xf32>, i32 -> vector<32x128xf32>
    %69 = arith.addf %65, %68 : vector<32x128xf32>
    %cst_29 = arith.constant dense<true> : vector<32x1xi1>
    %70 = arith.xori %20, %cst_29 : vector<32x1xi1>
    %c2 = arith.constant 2 : index
    %c0_30 = arith.constant 0 : index
    %71 = vector.load %arg4[%c2, %c0_30] : memref<4x128xf32, #tpu.memory_space<vmem>>, vector<1x128xf32>
    %c3 = arith.constant 3 : index
    %c0_31 = arith.constant 0 : index
    %72 = vector.load %arg4[%c3, %c0_31] : memref<4x128xf32, #tpu.memory_space<vmem>>, vector<1x128xf32>
    %cst_32 = arith.constant 0.000000e+00 : f32
    %73 = vector.shape_cast %70 : vector<32x1xi1> to vector<32x1xi1>
    %74 = vector.broadcast %73 : vector<32x1xi1> to vector<32x128xi1>
    %75 = vector.broadcast %cst_32 : f32 to vector<32x128xf32>
    %76 = arith.select %74, %69, %75 : vector<32x128xi1>, vector<32x128xf32>
    %cst_33 = arith.constant dense<0.000000e+00> : vector<128xf32>
    %77 = vector.multi_reduction <add>, %76, %cst_33 [0] : vector<32x128xf32> to vector<128xf32>
    %78 = vector.shape_cast %77 : vector<128xf32> to vector<1x128xf32>
    %cst_34 = arith.constant 0.0333333351 : f32
    %79 = vector.broadcast %cst_34 : f32 to vector<1x128xf32>
    %80 = arith.mulf %78, %79 : vector<1x128xf32>
    %81 = vector.broadcast %80 : vector<1x128xf32> to vector<32x128xf32>
    %82 = arith.subf %69, %81 : vector<32x128xf32>
    %83 = arith.mulf %82, %82 : vector<32x128xf32>
    %cst_35 = arith.constant 0.000000e+00 : f32
    %84 = vector.shape_cast %70 : vector<32x1xi1> to vector<32x1xi1>
    %85 = vector.broadcast %84 : vector<32x1xi1> to vector<32x128xi1>
    %86 = vector.broadcast %cst_35 : f32 to vector<32x128xf32>
    %87 = arith.select %85, %83, %86 : vector<32x128xi1>, vector<32x128xf32>
    %cst_36 = arith.constant dense<0.000000e+00> : vector<128xf32>
    %88 = vector.multi_reduction <add>, %87, %cst_36 [0] : vector<32x128xf32> to vector<128xf32>
    %89 = vector.shape_cast %88 : vector<128xf32> to vector<1x128xf32>
    %cst_37 = arith.constant 0.0333333351 : f32
    %90 = vector.broadcast %cst_37 : f32 to vector<1x128xf32>
    %91 = arith.mulf %89, %90 : vector<1x128xf32>
    %cst_38 = arith.constant 9.99999974E-6 : f32
    %92 = vector.broadcast %cst_38 : f32 to vector<1x128xf32>
    %93 = arith.addf %91, %92 : vector<1x128xf32>
    %94 = math.rsqrt %93 : vector<1x128xf32>
    %95 = arith.mulf %71, %94 : vector<1x128xf32>
    %96 = vector.broadcast %95 : vector<1x128xf32> to vector<32x128xf32>
    %97 = arith.mulf %82, %96 : vector<32x128xf32>
    %98 = vector.broadcast %72 : vector<1x128xf32> to vector<32x128xf32>
    %99 = arith.addf %97, %98 : vector<32x128xf32>
    %cst_39 = arith.constant 0.000000e+00 : f32
    %100 = vector.broadcast %cst_39 : f32 to vector<32x128xf32>
    %101 = arith.maximumf %99, %100 : vector<32x128xf32>
    %cst_40 = arith.constant 0.000000e+00 : f32
    %102 = vector.shape_cast %70 : vector<32x1xi1> to vector<32x1xi1>
    %103 = vector.broadcast %102 : vector<32x1xi1> to vector<32x128xi1>
    %104 = vector.broadcast %cst_40 : f32 to vector<32x128xf32>
    %105 = arith.select %103, %101, %104 : vector<32x128xi1>, vector<32x128xf32>
    %106 = vector.shape_cast %105 : vector<32x128xf32> to vector<2x16x128xf32>
    %cst_41 = arith.constant dense<0.000000e+00> : vector<2x128xf32>
    %107 = vector.multi_reduction <add>, %106, %cst_41 [1] : vector<2x16x128xf32> to vector<2x128xf32>
    %cst_42 = arith.constant 0.0666666701 : f32
    %108 = vector.broadcast %cst_42 : f32 to vector<2x128xf32>
    %109 = arith.mulf %107, %108 : vector<2x128xf32>
    %c0_43 = arith.constant 0 : index
    %c0_44 = arith.constant 0 : index
    %110 = vector.load %arg5[%c0_43, %c0_44] : memref<2x128xf32, #tpu.memory_space<vmem>>, vector<2x128xf32>
    tpu.vector_store %arg5[%c0_43, %c0_44], %109 {strides = array<i32>} : memref<2x128xf32, #tpu.memory_space<vmem>>, vector<2x128xf32>,
    return
  }
  func.func @transform_0(%arg0: i32) -> (i32, i32) {
    %c0_i32 = arith.constant 0 : i32
    %c0_i32_0 = arith.constant 0 : i32
    %c0_i32_1 = arith.constant 0 : i32
    return %c0_i32, %c0_i32_0 : i32, i32
  }
  func.func @transform_1(%arg0: i32) -> (i32, i32) {
    %c0_i32 = arith.constant 0 : i32
    %c0_i32_0 = arith.constant 0 : i32
    %c0_i32_1 = arith.constant 0 : i32
    return %c0_i32, %c0_i32_0 : i32, i32
  }
  func.func @transform_2(%arg0: i32) -> (i32, i32) {
    %c0_i32 = arith.constant 0 : i32
    %c0_i32_0 = arith.constant 0 : i32
    %c0_i32_1 = arith.constant 0 : i32
    return %c0_i32, %c0_i32_0 : i32, i32
  }
  func.func @transform_3(%arg0: i32) -> (i32, i32) {
    %c0_i32 = arith.constant 0 : i32
    %c0_i32_0 = arith.constant 0 : i32
    %c0_i32_1 = arith.constant 0 : i32
    return %c0_i32, %c0_i32_0 : i32, i32
  }
  func.func @transform_4(%arg0: i32) -> (i32, i32) {
    %c0_i32 = arith.constant 0 : i32
    %c0_i32_0 = arith.constant 0 : i32
    %c0_i32_1 = arith.constant 0 : i32
    return %c0_i32, %c0_i32_0 : i32, i32
  }
}

</mosaic_0001>

<llo_original>
// kernel: tpu_custom_call.1
$region0: #{tpu_custom_call.1}
  #allocation0 [shape = 'u32[]', space=smem, size = 0x4, offset = 0x4, fixed_abs, tag = 'smem constant byte address 0x4 - core index']
  #allocation1 [shape = 'u32[144,128]{1,0:T(1,128)}', space=vmem, size = 0x12000, scoped, tag = 'internal scratch']
  %s0 = inlined_call_operand.vmem [shape: bf16[32,8], index: 0, kind: input, shape index: {}]
  %s1 = inlined_call_operand.vmem [shape: bf16[24,128], index: 1, kind: input, shape index: {}]
  %s2 = inlined_call_operand.hbm [shape: bf16[256,128], index: 2, kind: input, shape index: {}]
  %s3 = inlined_call_operand.vmem [shape: f32[4,128], index: 3, kind: input, shape index: {}]
  %s4 = inlined_call_operand.hbm [shape: f32[2,128], index: 4, kind: output, shape index: {}]
  %s5 = sld [smem:[#allocation0]]
  $region30: #{tpu_custom_call.1} parent=0
    _
  %s7 = ssub.s32 1, %s5
  %s8 = scalar_select 0, %s7, %s5
  $region1: #{tpu_custom_call.1} parent=0
    #allocation2 [shape = 'u8[65536]{0}', space=vmem, size = 0x10000, scoped, tag = 'input window, operand 2, single buffered']
    #allocation3 [shape = 's32[1]{0}', space=sflag, size = 0x4, scoped, tag = 'scoped memory for tpu_custom_call.1']
    #allocation4 [shape = 's32[1]{0}', space=sflag, size = 0x4, scoped, tag = 'scoped memory for tpu_custom_call.1']
    #allocation5 [shape = 'u8[1024]{0}', space=vmem, size = 0x400, scoped, tag = 'output window, operand 0, single buffered']
    %9 = vsyncpa [#allocation3], 0
    %10 = vsyncpa [#allocation4], 0
    // Predicated region
    $region2: #{tpu_custom_call.1} parent=1 // pred_check
      _
    $region3: #{tpu_custom_call.1} parent=1 // pred_check_branch
      %12 = sbr.rel (0) target = $region5
    $region4: #{tpu_custom_call.1} parent=1 // pred_region
      _
    $region5: #{tpu_custom_call.1} parent=1 // pred_fallthru
      _
    // Predicated region
    $region6: #{tpu_custom_call.1} parent=1 // pred_check
      _
    $region7: #{tpu_custom_call.1} parent=1 // pred_check_branch
      %14 = sbr.rel (0) target = $region9
    $region8: #{tpu_custom_call.1} parent=1 // pred_region
      _
    $region9: #{tpu_custom_call.1} parent=1 // pred_fallthru
      _
    // Predicated region
    $region10: #{tpu_custom_call.1} parent=1 // pred_check
      _
    $region11: #{tpu_custom_call.1} parent=1 // pred_check_branch
      %16 = sbr.rel (0) target = $region13
    $region12: #{tpu_custom_call.1} parent=1 // pred_region
      %s18 = ssub.s32 2048, 2048
      %19 = vsyncadd [#allocation3], %s18
      %s20 = sshll.u32 [#allocation2], 4
      %s21 = int_to_ptr.vmem [resolvable:$true] %s20
      %26 = dma.hbm_to_vmem [thread:$0]  %s2, 2048, %s21, [#allocation3], 64, 64, 4
    $region13: #{tpu_custom_call.1} parent=1 // pred_fallthru
      _
    // Predicated region
    $region14: #{tpu_custom_call.1} parent=1 // pred_check
      _
    $region15: #{tpu_custom_call.1} parent=1 // pred_check_branch
      %28 = sbr.rel (0) target = $region17
    $region16: #{tpu_custom_call.1} parent=1 // pred_region
      _
    $region17: #{tpu_custom_call.1} parent=1 // pred_fallthru
      _
    // Predicated region
    $region18: #{tpu_custom_call.1} parent=1 // pred_check
      _
    $region19: #{tpu_custom_call.1} parent=1 // pred_check_branch
      %30 = sbr.rel (0) target = $region21
    $region20: #{tpu_custom_call.1} parent=1 // pred_region
      %31 = dma.done [#allocation3], 2048
    $region21: #{tpu_custom_call.1} parent=1 // pred_fallthru
      _
    %v33 = vlaneseq
    %v34 = vshrl.u32 %v33, 7
    %v35 = vadd.s32 %v34, 8
    %v36 = vadd.s32 %v34, 16
    %v37 = vadd.s32 %v34, 24
    %vm38 = vcmp.lt.s32.totalorder %v34, 0
    %v39 = vsub.s32 0, %v34
    %v40 = vsel %vm38, %v39, %v34
    %v41 = vshrl.u32 %v40, 4
    %v42 = vand.u32 %v40, 15
    %v43 = vsub.s32 0, %v42
    %v44 = vsel %vm38, %v43, %v42
    %vm45 = vcmp.lt.s32.totalorder %v35, 0
    %v46 = vsub.s32 0, %v35
    %v47 = vsel %vm45, %v46, %v35
    %v48 = vshrl.u32 %v47, 4
    %v49 = vand.u32 %v47, 15
    %v50 = vsub.s32 0, %v49
    %v51 = vsel %vm45, %v50, %v49
    %vm52 = vcmp.lt.s32.totalorder %v36, 0
    %v53 = vsub.s32 0, %v36
    %v54 = vsel %vm52, %v53, %v36
    %v55 = vshrl.u32 %v54, 4
    %v56 = vand.u32 %v54, 15
    %v57 = vsub.s32 0, %v56
    %v58 = vsel %vm52, %v57, %v56
    %vm59 = vcmp.lt.s32.totalorder %v37, 0
    %v60 = vsub.s32 0, %v37
    %v61 = vsel %vm59, %v60, %v37
    %v62 = vshrl.u32 %v61, 4
    %v63 = vand.u32 %v61, 15
    %v64 = vsub.s32 0, %v63
    %v65 = vsel %vm59, %v64, %v63
    %vm66 = vcmp.ne.s32.totalorder %v44, 0
    %vm67 = vcmp.ne.s32.totalorder %v51, 0
    %vm68 = vcmp.ne.s32.totalorder %v58, 0
    %vm69 = vcmp.ne.s32.totalorder %v65, 0
    %vm70 = vcmp.lt.s32.totalorder %v44, 0
    %vm71 = vcmp.lt.s32.totalorder %v51, 0
    %vm72 = vcmp.lt.s32.totalorder %v58, 0
    %vm73 = vcmp.lt.s32.totalorder %v65, 0
    %vm74 = vmand %vm70, %vm66
    %vm75 = vmand %vm71, %vm67
    %vm76 = vmand %vm72, %vm68
    %vm77 = vmand %vm73, %vm69
    %v78 = vadd.s32 %v44, 16
    %v79 = vadd.s32 %v51, 16
    %v80 = vadd.s32 %v58, 16
    %v81 = vadd.s32 %v65, 16
    %v82 = vsel %vm74, %v78, %v44
    %v83 = vsel %vm75, %v79, %v51
    %v84 = vsel %vm76, %v80, %v58
    %v85 = vsel %vm77, %v81, %v65
    %vm86 = vcmp.eq.s32.totalorder %v82, 0
    %vm87 = vcmp.eq.s32.totalorder %v83, 0
    %vm88 = vcmp.eq.s32.totalorder %v84, 0
    %vm89 = vcmp.eq.s32.totalorder %v85, 0
    %vm90 = vcmp.eq.s32.totalorder %v82, 15
    %vm91 = vcmp.eq.s32.totalorder %v83, 15
    %vm92 = vcmp.eq.s32.totalorder %v84, 15
    %vm93 = vcmp.eq.s32.totalorder %v85, 15
    %v94 = vld [vmem:[%s0] sm:$0xf]
    %v95 = vld [vmem:[%s0 + $0x4] sm:$0xf]
    %v96 = vld [vmem:[%s0 + $0x8] sm:$0xf]
    %v97 = vld [vmem:[%s0 + $0xc] sm:$0xf]
    %v98 = vld [vmem:[%s1] sm:$0xf]
    %v103 = vunpack.c.l.b16 %v94
    %v104 = vunpack.c.l.b16 %v95
    %v105 = vunpack.c.l.b16 %v96
    %v106 = vunpack.c.l.b16 %v97
    %v107 = vpack.c.b16 %v104, %v103
    %v108 = vpack.c.b16 %v106, %v105
    %vm109 = vcmask 64512
    %v111 = vsel %vm109, %v107, 0
    %v114 = vsel %vm109, %v108, 0
    %vm116 = vcmask 1043456
    %v118 = vsel %vm116, %v98, 0
    %120 = vmatprep.subr.bf16.mxu0 0
    %121 = vmatpush1.bf16.msra.mxu0 %v118
    %122 = vmatprep.subr.bf16.mxu0 0
    %123 = vmatpush1.bf16.msra.mxu0 0
    %124 = vmatprep.subr.bf16.mxu0 0
    %125 = vmatpush1.bf16.msra.mxu0 0
    %126 = vmatprep.subr.bf16.mxu0 0
    %127 = vmatpush1.bf16.msra.mxu0 0
    %128 = vmatprep.subr.bf16.mxu0 0
    %129 = vmatpush1.bf16.msra.mxu0 0
    %130 = vmatprep.subr.bf16.mxu0 0
    %131 = vmatpush1.bf16.msra.mxu0 0
    %132 = vmatprep.subr.bf16.mxu0 0
    %133 = vmatpush1.bf16.msra.mxu0 0
    %134 = vmatprep.subr.bf16.mxu0 0
    %135 = vmatpush1.bf16.msra.mxu0 0
    %136 = vmatprep.subr.bf16.mxu0 0
    %137 = vmatpush1.bf16.msra.mxu0 0
    %138 = vmatprep.subr.bf16.mxu0 0
    %139 = vmatpush1.bf16.msra.mxu0 0
    %140 = vmatprep.subr.bf16.mxu0 0
    %141 = vmatpush1.bf16.msra.mxu0 0
    %142 = vmatprep.subr.bf16.mxu0 0
    %143 = vmatpush1.bf16.msra.mxu0 0
    %144 = vmatprep.subr.bf16.mxu0 0
    %145 = vmatpush1.bf16.msra.mxu0 0
    %146 = vmatprep.subr.bf16.mxu0 0
    %147 = vmatpush1.bf16.msra.mxu0 0
    %148 = vmatprep.subr.bf16.mxu0 0
    %149 = vmatpush1.bf16.msra.mxu0 0
    %150 = vmatprep.subr.bf16.mxu0 0
    %151 = vmatpush1.bf16.msra.mxu0 0
    %152 = vmatprep.mubr.bf16.mxu0 0
    %153 = vmatmul.mubr.bf16.gmra.mrb[0].mxu0 %v111
    %v154 = vpop.f32.mrb[0].mxu0
    %v155 = vadd.f32 0.0, %v154
    %v156 = vpop.f32.mrb[0].mxu0
    %v157 = vpop.f32.mrb[0].mxu0
    %v158 = vadd.f32 0.0, %v157
    %v159 = vpop.f32.mrb[0].mxu0
    %160 = vmatprep.mubr.bf16.mxu0 0
    %161 = vmatmul.mubr.bf16.gmra.mrb[0].mxu0 %v114
    %v162 = vpop.f32.mrb[0].mxu0
    %v163 = vadd.f32 0.0, %v162
    %v164 = vpop.f32.mrb[0].mxu0
    %v165 = vpop.f32.mrb[0].mxu0
    %v166 = vadd.f32 0.0, %v165
    %v167 = vpop.f32.mrb[0].mxu0
    %168 = vdwg.mxu0
    %v169 = vld [vmem:[%s1 + $0x4] sm:$0xf]
    %v170 = vld [vmem:[%s1 + $0x8] sm:$0xf]
    %v172 = vsel %vm116, %v170, 0
    %174 = vmatprep.subr.bf16.mxu0 0
    %175 = vmatpush1.bf16.msra.mxu0 %v172
    %176 = vmatprep.subr.bf16.mxu0 0
    %177 = vmatpush1.bf16.msra.mxu0 0
    %178 = vmatprep.subr.bf16.mxu0 0
    %179 = vmatpush1.bf16.msra.mxu0 0
    %180 = vmatprep.subr.bf16.mxu0 0
    %181 = vmatpush1.bf16.msra.mxu0 0
    %182 = vmatprep.subr.bf16.mxu0 0
    %183 = vmatpush1.bf16.msra.mxu0 0
    %184 = vmatprep.subr.bf16.mxu0 0
    %185 = vmatpush1.bf16.msra.mxu0 0
    %186 = vmatprep.subr.bf16.mxu0 0
    %187 = vmatpush1.bf16.msra.mxu0 0
    %188 = vmatprep.subr.bf16.mxu0 0
    %189 = vmatpush1.bf16.msra.mxu0 0
    %190 = vmatprep.subr.bf16.mxu0 0
    %191 = vmatpush1.bf16.msra.mxu0 0
    %192 = vmatprep.subr.bf16.mxu0 0
    %193 = vmatpush1.bf16.msra.mxu0 0
    %194 = vmatprep.subr.bf16.mxu0 0
    %195 = vmatpush1.bf16.msra.mxu0 0
    %196 = vmatprep.subr.bf16.mxu0 0
    %197 = vmatpush1.bf16.msra.mxu0 0
    %198 = vmatprep.subr.bf16.mxu0 0
    %199 = vmatpush1.bf16.msra.mxu0 0
    %200 = vmatprep.subr.bf16.mxu0 0
    %201 = vmatpush1.bf16.msra.mxu0 0
    %202 = vmatprep.subr.bf16.mxu0 0
    %203 = vmatpush1.bf16.msra.mxu0 0
    %204 = vmatprep.subr.bf16.mxu0 0
    %205 = vmatpush1.bf16.msra.mxu0 0
    %206 = vmatprep.mubr.bf16.mxu0 0
    %207 = vmatmul.mubr.bf16.gmra.mrb[0].mxu0 %v111
    %v208 = vpop.f32.mrb[0].mxu0
    %v209 = vadd.f32 0.0, %v208
    %v210 = vpop.f32.mrb[0].mxu0
    %v211 = vpop.f32.mrb[0].mxu0
    %v212 = vadd.f32 0.0, %v211
    %v213 = vpop.f32.mrb[0].mxu0
    %214 = vmatprep.mubr.bf16.mxu0 0
    %215 = vmatmul.mubr.bf16.gmra.mrb[0].mxu0 %v114
    %v216 = vpop.f32.mrb[0].mxu0
    %v217 = vadd.f32 0.0, %v216
    %v218 = vpop.f32.mrb[0].mxu0
    %v219 = vpop.f32.mrb[0].mxu0
    %v220 = vadd.f32 0.0, %v219
    %v221 = vpop.f32.mrb[0].mxu0
    %222 = vdwg.mxu0
    %v223 = vrot.slane %v155, 7
    %v224 = vrot.slane %v158, 7
    %v225 = vrot.slane %v163, 7
    %v226 = vrot.slane %v166, 7
    %vm227 = vcmp.lt.s32.totalorder %v34, 1
    %v228 = vsel %vm227, %v225, %v226
    %v229 = vsel %vm227, %v224, %v225
    %v230 = vsel %vm227, %v223, %v224
    %v231 = vsel %vm227, %v226, %v223
    %v232 = vsel %vm86, 1, 0
    %v233 = vsel %vm87, 1, 0
    %v234 = vsel %vm88, 1, 0
    %v235 = vsel %vm89, 1, 0
    %vm236 = vcmp.eq.s32.totalorder %v232, 1
    %vm237 = vcmp.eq.s32.totalorder %v233, 1
    %vm238 = vcmp.eq.s32.totalorder %v234, 1
    %vm239 = vcmp.eq.s32.totalorder %v235, 1
    %v240 = vsel %vm236, 0.0, %v231
    %v241 = vsel %vm237, 0.0, %v230
    %v242 = vsel %vm238, 0.0, %v229
    %v243 = vsel %vm239, 0.0, %v228
    %v245 = vsel %vm116, %v169, 0
    %247 = vmatprep.subr.bf16.mxu0 0
    %248 = vmatpush1.bf16.msra.mxu0 %v245
    %249 = vmatprep.subr.bf16.mxu0 0
    %250 = vmatpush1.bf16.msra.mxu0 0
    %251 = vmatprep.subr.bf16.mxu0 0
    %252 = vmatpush1.bf16.msra.mxu0 0
    %253 = vmatprep.subr.bf16.mxu0 0
    %254 = vmatpush1.bf16.msra.mxu0 0
    %255 = vmatprep.subr.bf16.mxu0 0
    %256 = vmatpush1.bf16.msra.mxu0 0
    %257 = vmatprep.subr.bf16.mxu0 0
    %258 = vmatpush1.bf16.msra.mxu0 0
    %259 = vmatprep.subr.bf16.mxu0 0
    %260 = vmatpush1.bf16.msra.mxu0 0
    %261 = vmatprep.subr.bf16.mxu0 0
    %262 = vmatpush1.bf16.msra.mxu0 0
    %263 = vmatprep.subr.bf16.mxu0 0
    %264 = vmatpush1.bf16.msra.mxu0 0
    %265 = vmatprep.subr.bf16.mxu0 0
    %266 = vmatpush1.bf16.msra.mxu0 0
    %267 = vmatprep.subr.bf16.mxu0 0
    %268 = vmatpush1.bf16.msra.mxu0 0
    %269 = vmatprep.subr.bf16.mxu0 0
    %270 = vmatpush1.bf16.msra.mxu0 0
    %271 = vmatprep.subr.bf16.mxu0 0
    %272 = vmatpush1.bf16.msra.mxu0 0
    %273 = vmatprep.subr.bf16.mxu0 0
    %274 = vmatpush1.bf16.msra.mxu0 0
    %275 = vmatprep.subr.bf16.mxu0 0
    %276 = vmatpush1.bf16.msra.mxu0 0
    %277 = vmatprep.subr.bf16.mxu0 0
    %278 = vmatpush1.bf16.msra.mxu0 0
    %279 = vmatprep.mubr.bf16.mxu0 0
    %280 = vmatmul.mubr.bf16.gmra.mrb[0].mxu0 %v111
    %v281 = vpop.f32.mrb[0].mxu0
    %v282 = vadd.f32 %v240, %v281
    %v283 = vpop.f32.mrb[0].mxu0
    %v284 = vpop.f32.mrb[0].mxu0
    %v285 = vadd.f32 %v241, %v284
    %v286 = vpop.f32.mrb[0].mxu0
    %287 = vmatprep.mubr.bf16.mxu0 0
    %288 = vmatmul.mubr.bf16.gmra.mrb[0].mxu0 %v114
    %v289 = vpop.f32.mrb[0].mxu0
    %v290 = vadd.f32 %v242, %v289
    %v291 = vpop.f32.mrb[0].mxu0
    %v292 = vpop.f32.mrb[0].mxu0
    %v293 = vadd.f32 %v243, %v292
    %v294 = vpop.f32.mrb[0].mxu0
    %295 = vdwg.mxu0
    %v296 = vrot.slane %v209, 1
    %v297 = vrot.slane %v212, 1
    %v298 = vrot.slane %v217, 1
    %v299 = vrot.slane %v220, 1
    %vm300 = vcmp.lt.s32.totalorder %v34, 7
    %v301 = vsel %vm300, %v298, %v299
    %v302 = vsel %vm300, %v297, %v298
    %v303 = vsel %vm300, %v296, %v297
    %v304 = vsel %vm300, %v299, %v296
    %v305 = vsel %vm90, 1, 0
    %v306 = vsel %vm91, 1, 0
    %v307 = vsel %vm92, 1, 0
    %v308 = vsel %vm93, 1, 0
    %vm309 = vcmp.eq.s32.totalorder %v305, 1
    %vm310 = vcmp.eq.s32.totalorder %v306, 1
    %vm311 = vcmp.eq.s32.totalorder %v307, 1
    %vm312 = vcmp.eq.s32.totalorder %v308, 1
    %v313 = vsel %vm309, 0.0, %v303
    %v314 = vsel %vm310, 0.0, %v302
    %v315 = vsel %vm311, 0.0, %v301
    %v316 = vsel %vm312, 0.0, %v304
    %v317 = vadd.f32 %v282, %v313
    %v318 = vadd.f32 %v285, %v314
    %v319 = vadd.f32 %v290, %v315
    %v320 = vadd.f32 %v293, %v316
    %v321 = vld [vmem:[%s3] sm:$0x1]
    %v322 = vld [vmem:[%s3 + $0x1] sm:$0x1]
    %v323 = vadd.f32 %v317, %v318
    %v324 = vadd.f32 %v323, %v319
    %v325 = vadd.f32 %v324, %v320
    %v326 = vrot.slane %v325, 4
    %v327 = vadd.f32 %v325, %v326
    %v328 = vrot.slane %v327, 2
    %v329 = vadd.f32 %v327, %v328
    %v330 = vrot.slane %v329, 1
    %v331 = vadd.f32 %v329, %v330
    %v332 = vmul.f32 %v331, 0.03125
    %v333 = vsub.f32 %v317, %v332
    %v334 = vsub.f32 %v318, %v332
    %v335 = vsub.f32 %v319, %v332
    %v336 = vsub.f32 %v320, %v332
    %v337 = vmul.f32 %v333, %v333
    %v338 = vmul.f32 %v334, %v334
    %v339 = vmul.f32 %v335, %v335
    %v340 = vmul.f32 %v336, %v336
    %v341 = vadd.f32 %v337, %v338
    %v342 = vadd.f32 %v341, %v339
    %v343 = vadd.f32 %v342, %v340
    %v344 = vrot.slane %v343, 4
    %v345 = vadd.f32 %v343, %v344
    %v346 = vrot.slane %v345, 2
    %v347 = vadd.f32 %v345, %v346
    %v348 = vrot.slane %v347, 1
    %v349 = vadd.f32 %v347, %v348
    %v350 = vmul.f32 %v349, 0.03125
    %v351 = vadd.f32 %v350, 1e-05
    %v352 = vrsqrt.pop %v351
    %v353 = vmul.f32 %v321, %v352
    %v354 = vlaneseq
    %v355 = vshrl.u32 %v354, 7
    %v356 = vsub.s32 0, %v355
    %v357 = vrot.slane %v353, %v356
    %v358 = vmul.f32 %v333, %v357
    %v359 = vmul.f32 %v334, %v357
    %v360 = vmul.f32 %v335, %v357
    %v361 = vmul.f32 %v336, %v357
    %v362 = vlaneseq
    %v363 = vshrl.u32 %v362, 7
    %v364 = vsub.s32 0, %v363
    %v365 = vrot.slane %v322, %v364
    %v366 = vadd.f32 %v358, %v365
    %v367 = vadd.f32 %v359, %v365
    %v368 = vadd.f32 %v360, %v365
    %v369 = vadd.f32 %v361, %v365
    %v370 = vmax.f32 %v366, 0.0
    %v371 = vmax.f32 %v367, 0.0
    %v372 = vmax.f32 %v368, 0.0
    %v373 = vmax.f32 %v369, 0.0
    %v374 = vpack.c.bf16 %v371, %v370
    %v375 = vpack.c.bf16 %v373, %v372
    %v376 = vld [vmem:[#allocation2] sm:$0xf]
    %v377 = vld [vmem:[#allocation2 + $0x4] sm:$0xf]
    %v378 = vld [vmem:[#allocation2 + $0x8] sm:$0xf]
    %v379 = vld [vmem:[#allocation2 + $0xc] sm:$0xf]
    %v380 = vld [vmem:[#allocation2 + $0x10] sm:$0xf]
    %v381 = vld [vmem:[#allocation2 + $0x14] sm:$0xf]
    %v382 = vld [vmem:[#allocation2 + $0x18] sm:$0xf]
    %v383 = vld [vmem:[#allocation2 + $0x1c] sm:$0xf]
    %v384 = vld [vmem:[#allocation2 + $0x20] sm:$0xf]
    %v385 = vld [vmem:[#allocation2 + $0x24] sm:$0xf]
    %v386 = vld [vmem:[#allocation2 + $0x28] sm:$0xf]
    %v387 = vld [vmem:[#allocation2 + $0x2c] sm:$0xf]
    %v388 = vld [vmem:[#allocation2 + $0x30] sm:$0xf]
    %v389 = vld [vmem:[#allocation2 + $0x34] sm:$0xf]
    %v390 = vld [vmem:[#allocation2 + $0x38] sm:$0xf]
    %v391 = vld [vmem:[#allocation2 + $0x3c] sm:$0xf]
    %v392 = vld [vmem:[#allocation2 + $0x40] sm:$0xf]
    %v393 = vld [vmem:[#allocation2 + $0x44] sm:$0xf]
    %v394 = vld [vmem:[#allocation2 + $0x48] sm:$0xf]
    %v395 = vld [vmem:[#allocation2 + $0x4c] sm:$0xf]
    %v396 = vld [vmem:[#allocation2 + $0x50] sm:$0xf]
    %v397 = vld [vmem:[#allocation2 + $0x54] sm:$0xf]
    %v398 = vld [vmem:[#allocation2 + $0x58] sm:$0xf]
    %v399 = vld [vmem:[#allocation2 + $0x5c] sm:$0xf]
    %v400 = vld [vmem:[#allocation2 + $0x60] sm:$0xf]
    %v401 = vld [vmem:[#allocation2 + $0x64] sm:$0xf]
    %v402 = vld [vmem:[#allocation2 + $0x68] sm:$0xf]
    %v403 = vld [vmem:[#allocation2 + $0x6c] sm:$0xf]
    %v404 = vld [vmem:[#allocation2 + $0x70] sm:$0xf]
    %v405 = vld [vmem:[#allocation2 + $0x74] sm:$0xf]
    %v406 = vld [vmem:[#allocation2 + $0x78] sm:$0xf]
    %v407 = vld [vmem:[#allocation2 + $0x7c] sm:$0xf]
    %v424 = vunpack.c.l.b16 %v392
    %v425 = vunpack.c.l.b16 %v393
    %v426 = vunpack.c.l.b16 %v394
    %v427 = vunpack.c.l.b16 %v395
    %v428 = vunpack.c.l.b16 %v396
    %v429 = vunpack.c.l.b16 %v397
    %v430 = vunpack.c.l.b16 %v398
    %v431 = vunpack.c.l.b16 %v399
    %v432 = vunpack.c.l.b16 %v400
    %v433 = vunpack.c.l.b16 %v401
    %v434 = vunpack.c.l.b16 %v402
    %v435 = vunpack.c.l.b16 %v403
    %v436 = vunpack.c.l.b16 %v404
    %v437 = vunpack.c.l.b16 %v405
    %v438 = vunpack.c.l.b16 %v406
    %v439 = vunpack.c.l.b16 %v407
    %v440 = vpack.c.b16 %v425, %v424
    %v441 = vpack.c.b16 %v427, %v426
    %v442 = vpack.c.b16 %v429, %v428
    %v443 = vpack.c.b16 %v431, %v430
    %v444 = vpack.c.b16 %v433, %v432
    %v445 = vpack.c.b16 %v435, %v434
    %v446 = vpack.c.b16 %v437, %v436
    %v447 = vpack.c.b16 %v439, %v438
    %456 = vmatprep.subr.bf16.mxu0 0
    %457 = vmatpush1.bf16.msra.mxu0 %v440
    %458 = vmatprep.subr.bf16.mxu0 0
    %459 = vmatpush1.bf16.msra.mxu0 %v441
    %460 = vmatprep.subr.bf16.mxu0 0
    %461 = vmatpush1.bf16.msra.mxu0 %v442
    %462 = vmatprep.subr.bf16.mxu0 0
    %463 = vmatpush1.bf16.msra.mxu0 %v443
    %464 = vmatprep.subr.bf16.mxu0 0
    %465 = vmatpush1.bf16.msra.mxu0 %v444
    %466 = vmatprep.subr.bf16.mxu0 0
    %467 = vmatpush1.bf16.msra.mxu0 %v445
    %468 = vmatprep.subr.bf16.mxu0 0
    %469 = vmatpush1.bf16.msra.mxu0 %v446
    %470 = vmatprep.subr.bf16.mxu0 0
    %471 = vmatpush1.bf16.msra.mxu0 %v447
    %472 = vmatprep.subr.bf16.mxu0 0
    %473 = vmatpush1.bf16.msra.mxu0 0
    %474 = vmatprep.subr.bf16.mxu0 0
    %475 = vmatpush1.bf16.msra.mxu0 0
    %476 = vmatprep.subr.bf16.mxu0 0
    %477 = vmatpush1.bf16.msra.mxu0 0
    %478 = vmatprep.subr.bf16.mxu0 0
    %479 = vmatpush1.bf16.msra.mxu0 0
    %480 = vmatprep.subr.bf16.mxu0 0
    %481 = vmatpush1.bf16.msra.mxu0 0
    %482 = vmatprep.subr.bf16.mxu0 0
    %483 = vmatpush1.bf16.msra.mxu0 0
    %484 = vmatprep.subr.bf16.mxu0 0
    %485 = vmatpush1.bf16.msra.mxu0 0
    %486 = vmatprep.subr.bf16.mxu0 0
    %487 = vmatpush1.bf16.msra.mxu0 0
    %488 = vmatprep.mubr.bf16.mxu0 0
    %489 = vmatmul.mubr.bf16.gmra.mrb[0].mxu0 %v374
    %v490 = vpop.f32.mrb[0].mxu0
    %v491 = vadd.f32 0.0, %v490
    %v492 = vpop.f32.mrb[0].mxu0
    %v493 = vpop.f32.mrb[0].mxu0
    %v494 = vadd.f32 0.0, %v493
    %v495 = vpop.f32.mrb[0].mxu0
    %496 = vmatprep.mubr.bf16.mxu0 0
    %497 = vmatmul.mubr.bf16.gmra.mrb[0].mxu0 %v375
    %v498 = vpop.f32.mrb[0].mxu0
    %v499 = vadd.f32 0.0, %v498
    %v500 = vpop.f32.mrb[0].mxu0
    %v501 = vpop.f32.mrb[0].mxu0
    %v502 = vadd.f32 0.0, %v501
    %v503 = vpop.f32.mrb[0].mxu0
    %504 = vdwg.mxu0
    %v505 = vrot.slane %v491, 1
    %v506 = vrot.slane %v494, 1
    %v507 = vrot.slane %v499, 1
    %v508 = vrot.slane %v502, 1
    %v509 = vsel %vm300, %v507, %v508
    %v510 = vsel %vm300, %v506, %v507
    %v511 = vsel %vm300, %v505, %v506
    %v512 = vsel %vm300, %v508, %v505
    %v529 = vunpack.c.l.b16 %v376
    %v530 = vunpack.c.l.b16 %v377
    %v531 = vunpack.c.l.b16 %v378
    %v532 = vunpack.c.l.b16 %v379
    %v533 = vunpack.c.l.b16 %v380
    %v534 = vunpack.c.l.b16 %v381
    %v535 = vunpack.c.l.b16 %v382
    %v536 = vunpack.c.l.b16 %v383
    %v537 = vunpack.c.l.b16 %v384
    %v538 = vunpack.c.l.b16 %v385
    %v539 = vunpack.c.l.b16 %v386
    %v540 = vunpack.c.l.b16 %v387
    %v541 = vunpack.c.l.b16 %v388
    %v542 = vunpack.c.l.b16 %v389
    %v543 = vunpack.c.l.b16 %v390
    %v544 = vunpack.c.l.b16 %v391
    %v545 = vpack.c.b16 %v530, %v529
    %v546 = vpack.c.b16 %v532, %v531
    %v547 = vpack.c.b16 %v534, %v533
    %v548 = vpack.c.b16 %v536, %v535
    %v549 = vpack.c.b16 %v538, %v537
    %v550 = vpack.c.b16 %v540, %v539
    %v551 = vpack.c.b16 %v542, %v541
    %v552 = vpack.c.b16 %v544, %v543
    %561 = vmatprep.subr.bf16.mxu0 0
    %562 = vmatpush1.bf16.msra.mxu0 %v545
    %563 = vmatprep.subr.bf16.mxu0 0
    %564 = vmatpush1.bf16.msra.mxu0 %v546
    %565 = vmatprep.subr.bf16.mxu0 0
    %566 = vmatpush1.bf16.msra.mxu0 %v547
    %567 = vmatprep.subr.bf16.mxu0 0
    %568 = vmatpush1.bf16.msra.mxu0 %v548
    %569 = vmatprep.subr.bf16.mxu0 0
    %570 = vmatpush1.bf16.msra.mxu0 %v549
    %571 = vmatprep.subr.bf16.mxu0 0
    %572 = vmatpush1.bf16.msra.mxu0 %v550
    %573 = vmatprep.subr.bf16.mxu0 0
    %574 = vmatpush1.bf16.msra.mxu0 %v551
    %575 = vmatprep.subr.bf16.mxu0 0
    %576 = vmatpush1.bf16.msra.mxu0 %v552
    %577 = vmatprep.subr.bf16.mxu0 0
    %578 = vmatpush1.bf16.msra.mxu0 0
    %579 = vmatprep.subr.bf16.mxu0 0
    %580 = vmatpush1.bf16.msra.mxu0 0
    %581 = vmatprep.subr.bf16.mxu0 0
    %582 = vmatpush1.bf16.msra.mxu0 0
    %583 = vmatprep.subr.bf16.mxu0 0
    %584 = vmatpush1.bf16.msra.mxu0 0
    %585 = vmatprep.subr.bf16.mxu0 0
    %586 = vmatpush1.bf16.msra.mxu0 0
    %587 = vmatprep.subr.bf16.mxu0 0
    %588 = vmatpush1.bf16.msra.mxu0 0
    %589 = vmatprep.subr.bf16.mxu0 0
    %590 = vmatpush1.bf16.msra.mxu0 0
    %591 = vmatprep.subr.bf16.mxu0 0
    %592 = vmatpush1.bf16.msra.mxu0 0
    %593 = vmatprep.mubr.bf16.mxu0 0
    %594 = vmatmul.mubr.bf16.gmra.mrb[0].mxu0 %v374
    %v595 = vpop.f32.mrb[0].mxu0
    %v596 = vadd.f32 %v511, %v595
    %v597 = vpop.f32.mrb[0].mxu0
    %v598 = vpop.f32.mrb[0].mxu0
    %v599 = vadd.f32 %v510, %v598
    %v600 = vpop.f32.mrb[0].mxu0
    %601 = vmatprep.mubr.bf16.mxu0 0
    %602 = vmatmul.mubr.bf16.gmra.mrb[0].mxu0 %v375
    %v603 = vpop.f32.mrb[0].mxu0
    %v604 = vadd.f32 %v509, %v603
    %v605 = vpop.f32.mrb[0].mxu0
    %v606 = vpop.f32.mrb[0].mxu0
    %v607 = vadd.f32 %v512, %v606
    %v608 = vpop.f32.mrb[0].mxu0
    %609 = vdwg.mxu0
    %vm610 = vmxor %vm90, 1
    %vm611 = vmxor %vm91, 1
    %vm612 = vmxor %vm92, 1
    %vm613 = vmxor %vm93, 1
    %v614 = vld [vmem:[%s3 + $0x2] sm:$0x1]
    %v615 = vld [vmem:[%s3 + $0x3] sm:$0x1]
    %v616 = vsel %vm610, 1, 0
    %v617 = vsel %vm611, 1, 0
    %v618 = vsel %vm612, 1, 0
    %v619 = vsel %vm613, 1, 0
    %vm620 = vcmp.eq.s32.totalorder %v616, 1
    %vm621 = vcmp.eq.s32.totalorder %v617, 1
    %vm622 = vcmp.eq.s32.totalorder %v618, 1
    %vm623 = vcmp.eq.s32.totalorder %v619, 1
    %v624 = vsel %vm620, %v596, 0.0
    %v625 = vsel %vm621, %v599, 0.0
    %v626 = vsel %vm622, %v604, 0.0
    %v627 = vsel %vm623, %v607, 0.0
    %v628 = vadd.f32 %v624, %v625
    %v629 = vadd.f32 %v628, %v626
    %v630 = vadd.f32 %v629, %v627
    %v631 = vrot.slane %v630, 4
    %v632 = vadd.f32 %v630, %v631
    %v633 = vrot.slane %v632, 2
    %v634 = vadd.f32 %v632, %v633
    %v635 = vrot.slane %v634, 1
    %v636 = vadd.f32 %v634, %v635
    %v637 = vmul.f32 %v636, 0.033333335
    %v638 = vsub.f32 %v596, %v637
    %v639 = vsub.f32 %v599, %v637
    %v640 = vsub.f32 %v604, %v637
    %v641 = vsub.f32 %v607, %v637
    %v642 = vmul.f32 %v638, %v638
    %v643 = vmul.f32 %v639, %v639
    %v644 = vmul.f32 %v640, %v640
    %v645 = vmul.f32 %v641, %v641
    %v646 = vsel %vm620, %v642, 0.0
    %v647 = vsel %vm621, %v643, 0.0
    %v648 = vsel %vm622, %v644, 0.0
    %v649 = vsel %vm623, %v645, 0.0
    %v650 = vadd.f32 %v646, %v647
    %v651 = vadd.f32 %v650, %v648
    %v652 = vadd.f32 %v651, %v649
    %v653 = vrot.slane %v652, 4
    %v654 = vadd.f32 %v652, %v653
    %v655 = vrot.slane %v654, 2
    %v656 = vadd.f32 %v654, %v655
    %v657 = vrot.slane %v656, 1
    %v658 = vadd.f32 %v656, %v657
    %v659 = vmul.f32 %v658, 0.033333335
    %v660 = vadd.f32 %v659, 1e-05
    %v661 = vrsqrt.pop %v660
    %v662 = vmul.f32 %v614, %v661
    %v663 = vlaneseq
    %v664 = vshrl.u32 %v663, 7
    %v665 = vsub.s32 0, %v664
    %v666 = vrot.slane %v662, %v665
    %v667 = vmul.f32 %v638, %v666
    %v668 = vmul.f32 %v639, %v666
    %v669 = vmul.f32 %v640, %v666
    %v670 = vmul.f32 %v641, %v666
    %v671 = vlaneseq
    %v672 = vshrl.u32 %v671, 7
    %v673 = vsub.s32 0, %v672
    %v674 = vrot.slane %v615, %v673
    %v675 = vadd.f32 %v667, %v674
    %v676 = vadd.f32 %v668, %v674
    %v677 = vadd.f32 %v669, %v674
    %v678 = vadd.f32 %v670, %v674
    %v679 = vmax.f32 %v675, 0.0
    %v680 = vmax.f32 %v676, 0.0
    %v681 = vmax.f32 %v677, 0.0
    %v682 = vmax.f32 %v678, 0.0
    %v683 = vsel %vm620, %v679, 0.0
    %v684 = vsel %vm621, %v680, 0.0
    %v685 = vsel %vm622, %v681, 0.0
    %v686 = vsel %vm623, %v682, 0.0
    %v687 = vadd.f32 %v683, %v684
    %v688 = vrot.slane %v687, 4
    %v689 = vadd.f32 %v687, %v688
    %v690 = vrot.slane %v689, 2
    %v691 = vadd.f32 %v689, %v690
    %v692 = vrot.slane %v691, 1
    %v693 = vadd.f32 %v691, %v692
    %v694 = vadd.f32 %v685, %v686
    %v695 = vrot.slane %v694, 4
    %v696 = vadd.f32 %v694, %v695
    %v697 = vrot.slane %v696, 2
    %v698 = vadd.f32 %v696, %v697
    %v699 = vrot.slane %v698, 1
    %v700 = vadd.f32 %v698, %v699
    %v701 = vmul.f32 %v693, 0.06666667
    %v702 = vmul.f32 %v700, 0.06666667
    %vm705 = vcmask 1041409
    %v706 = vsel %vm705, %v702, %v701
    %708 = vst [vmem:[#allocation5] sm:$0x3] %v706
    // Predicated region
    $region22: #{tpu_custom_call.1} parent=1 // pred_check
      _
    $region23: #{tpu_custom_call.1} parent=1 // pred_check_branch
      %710 = sbr.rel (0) target = $region25
    $region24: #{tpu_custom_call.1} parent=1 // pred_region
      %s712 = ssub.s32 32, 32
      %713 = vsyncadd [#allocation4], %s712
      %s715 = sshll.u32 [#allocation5], 4
      %s716 = int_to_ptr.vmem [resolvable:$true] %s715
      %718 = dma.vmem_to_hbm [thread:$0]  %s716, 32, %s4, [#allocation4]
    $region25: #{tpu_custom_call.1} parent=1 // pred_fallthru
      _
    // Predicated region
    $region26: #{tpu_custom_call.1} parent=1 // pred_check
      _
    $region27: #{tpu_custom_call.1} parent=1 // pred_check_branch
      %720 = sbr.rel (0) target = $region29
    $region28: #{tpu_custom_call.1} parent=1 // pred_region
      %721 = dma.done [#allocation4], 32
    $region29: #{tpu_custom_call.1} parent=1 // pred_fallthru
      _
    %722 = vsyncpa [#allocation3], 1
    %723 = vsyncpa [#allocation4], 1

</llo_original>
